<compile_context>
chip_gen: v6e
topology: v6e:2x2x1
jax: 0.10.0
libtpu: 0.0.40
codegen_flags: <defaults>
</compile_context>

<pallas_src>
import functools

import jax
import jax.numpy as jnp
from jax.experimental import pallas as pl


def _bridge_kernel(h_ref, c_ref, w_fw_ref, w_bw_ref, b_ref, out_ref, *,
                   num_layers, batch, enc_hidden, dec_hidden):
    L, bs, E, D = num_layers, batch, enc_hidden, dec_hidden

    h = h_ref[...].reshape(L, 2, bs, E)   # leading-dim split only (free)
    c = c_ref[...].reshape(L, 2, bs, E)

    # Stack all 2L independent left-hand sides along M (sublane concat only):
    #   rows [i*bs:(i+1)*bs] = layer-i h_cat for i < L, layer-(i-L) c_cat for i >= L,
    # kept split by direction so the fw/bw concat never materializes anywhere.
    x_fw = jnp.concatenate([h[:, 0].reshape(L * bs, E),
                            c[:, 0].reshape(L * bs, E)], axis=0)     # (2L*bs, E)
    x_bw = jnp.concatenate([h[:, 1].reshape(L * bs, E),
                            c[:, 1].reshape(L * bs, E)], axis=0)     # (2L*bs, E)

    # (2L*bs, 2L*D): block (i, j) = x_i @ W_j.  Only the diagonal blocks are needed,
    # but packing N up to 2L*D (= 128 at demo shapes) fills the MXU columns in one pass.
    p = (jnp.dot(x_fw, w_fw_ref[...], preferred_element_type=jnp.float32)
         + jnp.dot(x_bw, w_bw_ref[...], preferred_element_type=jnp.float32)
         + b_ref[...])
    a = jnp.tanh(p)   # EUP slot; off-diagonal junk is computed but free.

    blocks = [a[i * bs:(i + 1) * bs, i * D:(i + 1) * D] for i in range(2 * L)]
    out_ref[...] = jnp.concatenate(blocks, axis=-1).astype(out_ref.dtype)


@functools.partial(jax.jit,
                   static_argnames=("num_layers", "enc_hidden_dim", "dec_hidden_dim"))
def hidden_bridge(h, c, W_h, b_h, W_c, b_c, *,
                  num_layers, enc_hidden_dim, dec_hidden_dim):
    """Pallas implementation of HiddenBridge.forward.

    h, c : (2*num_layers, bs, enc_hidden_dim)
    W_h, W_c : (num_layers, 2*enc_hidden_dim, dec_hidden_dim)   (transposed vs nn.Linear)
    b_h, b_c : (num_layers, dec_hidden_dim)
    returns (new_h, new_c), each (num_layers, bs, dec_hidden_dim)
    """
    L, E, D = num_layers, enc_hidden_dim, dec_hidden_dim
    total, bs, E_in = h.shape
    assert total == 2 * L and E_in == E

    # Parameter-only packing (folds/hoists under jit; activations are untouched):
    #   columns of w_cat = [W_h[0] | ... | W_h[L-1] | W_c[0] | ... | W_c[L-1]]
    #   split by K-halves so the kernel never concatenates fw/bw activations.
    w_cat = jnp.concatenate([W_h[l] for l in range(L)]
                            + [W_c[l] for l in range(L)], axis=-1)   # (2E, 2L*D)
    w_fw = w_cat[:E]                                                  # (E, 2L*D)
    w_bw = w_cat[E:]                                                  # (E, 2L*D)
    b_cat = jnp.concatenate([b_h[l] for l in range(L)]
                            + [b_c[l] for l in range(L)],
                            axis=-1).reshape(1, 2 * L * D)            # (1, 2L*D)

    kernel = functools.partial(_bridge_kernel, num_layers=L, batch=bs,
                               enc_hidden=E, dec_hidden=D)

    # Single invocation, no grid: every ref is the whole array, resident in VMEM.
    packed = pl.pallas_call(
        kernel,
        out_shape=jax.ShapeDtypeStruct((bs, 2 * L * D), h.dtype),
    )(h, c, w_fw, w_bw, b_cat)

    out = packed.reshape(bs, 2 * L, D).transpose(1, 0, 2)   # (2L, bs, D), layout glue
    return out[:L], out[L:]


def reference_bridge(h, c, W_h, b_h, W_c, b_c, *, num_layers, enc_hidden_dim):
    """Pure-JAX reference matching the PyTorch forward."""
    _, bs, E = h.shape
    h4 = h.reshape(num_layers, 2, bs, E)
    c4 = c.reshape(num_layers, 2, bs, E)
    new_h, new_c = [], []
    for i in range(num_layers):
        h_cat = jnp.concatenate([h4[i, 0], h4[i, 1]], axis=-1)
        c_cat = jnp.concatenate([c4[i, 0], c4[i, 1]], axis=-1)
        new_h.append(jnp.tanh(h_cat @ W_h[i] + b_h[i])[None])
        new_c.append(jnp.tanh(c_cat @ W_c[i] + b_c[i])[None])
    return jnp.concatenate(new_h, 0), jnp.concatenate(new_c, 0)


if __name__ == "__main__":
    # Small shapes consistent with the module.
    num_layers = 2
    enc_hidden_dim = 32
    dec_hidden_dim = 32
    bs = 8

    key = jax.random.PRNGKey(0)
    k_h, k_c, k_wh, k_bh, k_wc, k_bc = jax.random.split(key, 6)

    h = jax.random.normal(k_h, (2 * num_layers, bs, enc_hidden_dim), jnp.float32)
    c = jax.random.normal(k_c, (2 * num_layers, bs, enc_hidden_dim), jnp.float32)

    # nn.Linear-like uniform init, stored as (L, in, out) i.e. transposed vs torch (out, in).
    fan_in = 2 * enc_hidden_dim
    bound = 1.0 / (fan_in ** 0.5)
    W_h = jax.random.uniform(k_wh, (num_layers, 2 * enc_hidden_dim, dec_hidden_dim),
                             jnp.float32, -bound, bound)
    b_h = jax.random.uniform(k_bh, (num_layers, dec_hidden_dim),
                             jnp.float32, -bound, bound)
    W_c = jax.random.uniform(k_wc, (num_layers, 2 * enc_hidden_dim, dec_hidden_dim),
                             jnp.float32, -bound, bound)
    b_c = jax.random.uniform(k_bc, (num_layers, dec_hidden_dim),
                             jnp.float32, -bound, bound)

    new_h, new_c = hidden_bridge(
        h, c, W_h, b_h, W_c, b_c,
        num_layers=num_layers,
        enc_hidden_dim=enc_hidden_dim,
        dec_hidden_dim=dec_hidden_dim,
    )
    jax.block_until_ready((new_h, new_c))

    ref_h, ref_c = reference_bridge(
        h, c, W_h, b_h, W_c, b_c,
        num_layers=num_layers, enc_hidden_dim=enc_hidden_dim)

    assert new_h.shape == (num_layers, bs, dec_hidden_dim)
    assert new_c.shape == (num_layers, bs, dec_hidden_dim)
    assert jnp.allclose(new_h, ref_h, atol=5e-5, rtol=1e-5)
    assert jnp.allclose(new_c, ref_c, atol=5e-5, rtol=1e-5)

    print("KERNEL_OK")
</pallas_src>

<mosaic_0001>
module attributes {stable_mosaic.version = 11 : i64} {
  func.func @_bridge_kernel(%arg0: memref<4x8x32xf32, #tpu.memory_space<vmem>>, %arg1: memref<4x8x32xf32, #tpu.memory_space<vmem>>, %arg2: memref<32x128xf32, #tpu.memory_space<vmem>>, %arg3: memref<32x128xf32, #tpu.memory_space<vmem>>, %arg4: memref<1x128xf32, #tpu.memory_space<vmem>>, %arg5: memref<8x128xf32, #tpu.memory_space<vmem>>) attributes {dimension_semantics = [], scalar_prefetch = 0 : i64, scratch_operands = 0 : i64, tpu.core_type = #tpu.core_type<tc>} {
    %c0 = arith.constant 0 : index
    %c0_0 = arith.constant 0 : index
    %c0_1 = arith.constant 0 : index
    %0 = vector.load %arg0[%c0, %c0_0, %c0_1] : memref<4x8x32xf32, #tpu.memory_space<vmem>>, vector<4x8x32xf32>
    %1 = vector.shape_cast %0 : vector<4x8x32xf32> to vector<2x2x8x32xf32>
    %c0_2 = arith.constant 0 : index
    %c0_3 = arith.constant 0 : index
    %c0_4 = arith.constant 0 : index
    %2 = vector.load %arg1[%c0_2, %c0_3, %c0_4] : memref<4x8x32xf32, #tpu.memory_space<vmem>>, vector<4x8x32xf32>
    %3 = vector.shape_cast %2 : vector<4x8x32xf32> to vector<2x2x8x32xf32>
    %4 = vector.extract_strided_slice %1 {offsets = [0, 0, 0, 0], sizes = [2, 1, 8, 32], strides = [1, 1, 1, 1]} : vector<2x2x8x32xf32> to vector<2x1x8x32xf32>
    %5 = vector.shape_cast %4 : vector<2x1x8x32xf32> to vector<2x8x32xf32>
    %6 = vector.shape_cast %5 : vector<2x8x32xf32> to vector<16x32xf32>
    %7 = vector.extract_strided_slice %3 {offsets = [0, 0, 0, 0], sizes = [2, 1, 8, 32], strides = [1, 1, 1, 1]} : vector<2x2x8x32xf32> to vector<2x1x8x32xf32>
    %8 = vector.shape_cast %7 : vector<2x1x8x32xf32> to vector<2x8x32xf32>
    %9 = vector.shape_cast %8 : vector<2x8x32xf32> to vector<16x32xf32>
    %10 = tpu.concatenate %6, %9 in 0 : vector<16x32xf32>, vector<16x32xf32> -> vector<32x32xf32>
    %11 = vector.extract_strided_slice %1 {offsets = [0, 1, 0, 0], sizes = [2, 1, 8, 32], strides = [1, 1, 1, 1]} : vector<2x2x8x32xf32> to vector<2x1x8x32xf32>
    %12 = vector.shape_cast %11 : vector<2x1x8x32xf32> to vector<2x8x32xf32>
    %13 = vector.shape_cast %12 : vector<2x8x32xf32> to vector<16x32xf32>
    %14 = vector.extract_strided_slice %3 {offsets = [0, 1, 0, 0], sizes = [2, 1, 8, 32], strides = [1, 1, 1, 1]} : vector<2x2x8x32xf32> to vector<2x1x8x32xf32>
    %15 = vector.shape_cast %14 : vector<2x1x8x32xf32> to vector<2x8x32xf32>
    %16 = vector.shape_cast %15 : vector<2x8x32xf32> to vector<16x32xf32>
    %17 = tpu.concatenate %13, %16 in 0 : vector<16x32xf32>, vector<16x32xf32> -> vector<32x32xf32>
    %c0_5 = arith.constant 0 : index
    %c0_6 = arith.constant 0 : index
    %18 = vector.load %arg2[%c0_5, %c0_6] : memref<32x128xf32, #tpu.memory_space<vmem>>, vector<32x128xf32>
    %cst = arith.constant dense<0.000000e+00> : vector<32x128xf32>
    %19 = tpu.matmul %10, %18, %cst {dimension_numbers = #tpu.dot_dimension_numbers<[1], [0], [0], [1], [0, 0, 1, 1], [], []>} : vector<32x32xf32>, vector<32x128xf32>, vector<32x128xf32> -> vector<32x128xf32>
    %c0_7 = arith.constant 0 : index
    %c0_8 = arith.constant 0 : index
    %20 = vector.load %arg3[%c0_7, %c0_8] : memref<32x128xf32, #tpu.memory_space<vmem>>, vector<32x128xf32>
    %cst_9 = arith.constant dense<0.000000e+00> : vector<32x128xf32>
    %21 = tpu.matmul %17, %20, %cst_9 {dimension_numbers = #tpu.dot_dimension_numbers<[1], [0], [0], [1], [0, 0, 1, 1], [], []>} : vector<32x32xf32>, vector<32x128xf32>, vector<32x128xf32> -> vector<32x128xf32>
    %22 = arith.addf %19, %21 : vector<32x128xf32>
    %c0_10 = arith.constant 0 : index
    %c0_11 = arith.constant 0 : index
    %23 = vector.load %arg4[%c0_10, %c0_11] : memref<1x128xf32, #tpu.memory_space<vmem>>, vector<1x128xf32>
    %24 = vector.broadcast %23 : vector<1x128xf32> to vector<32x128xf32>
    %25 = arith.addf %22, %24 : vector<32x128xf32>
    %26 = math.tanh %25 : vector<32x128xf32>
    %27 = vector.extract_strided_slice %26 {offsets = [0, 0], sizes = [8, 32], strides = [1, 1]} : vector<32x128xf32> to vector<8x32xf32>
    %28 = vector.extract_strided_slice %26 {offsets = [8, 32], sizes = [8, 32], strides = [1, 1]} : vector<32x128xf32> to vector<8x32xf32>
    %29 = vector.extract_strided_slice %26 {offsets = [16, 64], sizes = [8, 32], strides = [1, 1]} : vector<32x128xf32> to vector<8x32xf32>
    %30 = vector.extract_strided_slice %26 {offsets = [24, 96], sizes = [8, 32], strides = [1, 1]} : vector<32x128xf32> to vector<8x32xf32>
    %31 = tpu.concatenate %27, %28, %29, %30 in 1 : vector<8x32xf32>, vector<8x32xf32>, vector<8x32xf32>, vector<8x32xf32> -> vector<8x128xf32>
    %c0_12 = arith.constant 0 : index
    %c0_13 = arith.constant 0 : index
    %32 = vector.load %arg5[%c0_12, %c0_13] : memref<8x128xf32, #tpu.memory_space<vmem>>, vector<8x128xf32>
    tpu.vector_store %arg5[%c0_12, %c0_13], %31 {strides = array<i32>} : memref<8x128xf32, #tpu.memory_space<vmem>>, vector<8x128xf32>,
    return
  }
}

</mosaic_0001>

<llo_original>
// kernel: hidden_bridge.1
$region0: #{hidden_bridge.1}
  #allocation0 [shape = 'u32[]', space=smem, size = 0x4, offset = 0x4, fixed_abs, tag = 'smem constant byte address 0x4 - core index']
  #allocation1 [shape = 'u32[144,128]{1,0:T(1,128)}', space=vmem, size = 0x12000, scoped, tag = 'internal scratch']
  %s0 = inlined_call_operand.vmem [shape: f32[4,8,32], index: 0, kind: input, shape index: {}]
  %s1 = inlined_call_operand.vmem [shape: f32[4,8,32], index: 1, kind: input, shape index: {}]
  %s2 = inlined_call_operand.vmem [shape: f32[32,128], index: 2, kind: input, shape index: {}]
  %s3 = inlined_call_operand.vmem [shape: f32[32,128], index: 3, kind: input, shape index: {}]
  %s4 = inlined_call_operand.vmem [shape: f32[1,128], index: 4, kind: input, shape index: {}]
  %s5 = inlined_call_operand.vmem [shape: f32[8,128], index: 5, kind: output, shape index: {}]
  %s6 = sld [smem:[#allocation0]]
  $region30: #{hidden_bridge.1} parent=0
    _
  %s8 = ssub.s32 1, %s6
  %s9 = scalar_select 0, %s8, %s6
  // Predicated region
  $region2: #{hidden_bridge.1} parent=0 // pred_check
    _
  $region3: #{hidden_bridge.1} parent=0 // pred_check_branch
    %11 = sbr.rel (0) target = $region5
  $region4: #{hidden_bridge.1} parent=0 // pred_region
    _
  $region5: #{hidden_bridge.1} parent=0 // pred_fallthru
    _
  // Predicated region
  $region6: #{hidden_bridge.1} parent=0 // pred_check
    _
  $region7: #{hidden_bridge.1} parent=0 // pred_check_branch
    %13 = sbr.rel (0) target = $region9
  $region8: #{hidden_bridge.1} parent=0 // pred_region
    _
  $region9: #{hidden_bridge.1} parent=0 // pred_fallthru
    _
  // Predicated region
  $region10: #{hidden_bridge.1} parent=0 // pred_check
    _
  $region11: #{hidden_bridge.1} parent=0 // pred_check_branch
    %15 = sbr.rel (0) target = $region13
  $region12: #{hidden_bridge.1} parent=0 // pred_region
    _
  $region13: #{hidden_bridge.1} parent=0 // pred_fallthru
    _
  // Predicated region
  $region14: #{hidden_bridge.1} parent=0 // pred_check
    _
  $region15: #{hidden_bridge.1} parent=0 // pred_check_branch
    %17 = sbr.rel (0) target = $region17
  $region16: #{hidden_bridge.1} parent=0 // pred_region
    _
  $region17: #{hidden_bridge.1} parent=0 // pred_fallthru
    _
  // Predicated region
  $region18: #{hidden_bridge.1} parent=0 // pred_check
    _
  $region19: #{hidden_bridge.1} parent=0 // pred_check_branch
    %19 = sbr.rel (0) target = $region21
  $region20: #{hidden_bridge.1} parent=0 // pred_region
    _
  $region21: #{hidden_bridge.1} parent=0 // pred_fallthru
    _
  %v20 = vld [vmem:[%s0] sm:$0xff]
  %v21 = vld [vmem:[%s0 + $0x8] sm:$0xff]
  %v22 = vld [vmem:[%s0 + $0x10] sm:$0xff]
  %v23 = vld [vmem:[%s0 + $0x18] sm:$0xff]
  %v24 = vld [vmem:[%s1] sm:$0xff]
  %v25 = vld [vmem:[%s1 + $0x8] sm:$0xff]
  %v26 = vld [vmem:[%s1 + $0x10] sm:$0xff]
  %v27 = vld [vmem:[%s1 + $0x18] sm:$0xff]
  %v28 = vld [vmem:[%s2] sm:$0xff]
  %v29 = vld [vmem:[%s2 + $0x8] sm:$0xff]
  %v30 = vld [vmem:[%s2 + $0x10] sm:$0xff]
  %v31 = vld [vmem:[%s2 + $0x18] sm:$0xff]
  %v32 = vld [vmem:[%s3] sm:$0xff]
  %v33 = vld [vmem:[%s3 + $0x8] sm:$0xff]
  %v34 = vld [vmem:[%s3 + $0x10] sm:$0xff]
  %v35 = vld [vmem:[%s3 + $0x18] sm:$0xff]
  %vm36 = vcmask 261120
  %v38 = vsel %vm36, %v21, 0
  %v41 = vsel %vm36, %v23, 0
  %v44 = vsel %vm36, %v25, 0
  %v47 = vsel %vm36, %v27, 0
  %49 = vmatprep.subr.mxu0 0.0
  %50 = vmatpush1.msra.mxu0 0.0
  %51 = vmatprep.subr.mxu0 0.0
  %52 = vmatpush1.msra.mxu0 0.0
  %53 = vmatprep.subr.mxu0 0.0
  %54 = vmatpush1.msra.mxu0 0.0
  %55 = vmatprep.subr.mxu0 0.0
  %56 = vmatpush1.msra.mxu0 0.0
  %57 = vmatprep.subr.mxu0 0.0
  %58 = vmatpush1.msra.mxu0 0.0
  %59 = vmatprep.subr.mxu0 0.0
  %60 = vmatpush1.msra.mxu0 0.0
  %61 = vmatprep.subr.mxu0 0.0
  %62 = vmatpush1.msra.mxu0 0.0
  %63 = vmatprep.subr.mxu0 0.0
  %64 = vmatpush1.msra.mxu0 0.0
  %65 = vmatprep.subr.mxu0 0.0
  %66 = vmatpush1.msra.mxu0 0.0
  %67 = vmatprep.subr.mxu0 0.0
  %68 = vmatpush1.msra.mxu0 0.0
  %69 = vmatprep.subr.mxu0 0.0
  %70 = vmatpush1.msra.mxu0 0.0
  %71 = vmatprep.subr.mxu0 0.0
  %72 = vmatpush1.msra.mxu0 0.0
  %73 = vmatprep.subr.mxu0 0.0
  %74 = vmatpush1.msra.mxu0 %v35
  %75 = vmatprep.subr.mxu0 0.0
  %76 = vmatpush1.msra.mxu0 %v34
  %77 = vmatprep.subr.mxu0 0.0
  %78 = vmatpush1.msra.mxu0 %v33
  %79 = vmatprep.subr.mxu0 0.0
  %80 = vmatpush1.msra.mxu0 %v32
  %81 = vmatprep.subr.mxu0 0.0
  %82 = vmatpush2.msra.mxu0 0.0
  %83 = vmatprep.subr.mxu0 0.0
  %84 = vmatpush2.msra.mxu0 0.0
  %85 = vmatprep.subr.mxu0 0.0
  %86 = vmatpush2.msra.mxu0 0.0
  %87 = vmatprep.subr.mxu0 0.0
  %88 = vmatpush2.msra.mxu0 0.0
  %89 = vmatprep.subr.mxu0 0.0
  %90 = vmatpush2.msra.mxu0 0.0
  %91 = vmatprep.subr.mxu0 0.0
  %92 = vmatpush2.msra.mxu0 0.0
  %93 = vmatprep.subr.mxu0 0.0
  %94 = vmatpush2.msra.mxu0 0.0
  %95 = vmatprep.subr.mxu0 0.0
  %96 = vmatpush2.msra.mxu0 0.0
  %97 = vmatprep.subr.mxu0 0.0
  %98 = vmatpush2.msra.mxu0 0.0
  %99 = vmatprep.subr.mxu0 0.0
  %100 = vmatpush2.msra.mxu0 0.0
  %101 = vmatprep.subr.mxu0 0.0
  %102 = vmatpush2.msra.mxu0 0.0
  %103 = vmatprep.subr.mxu0 0.0
  %104 = vmatpush2.msra.mxu0 0.0
  %105 = vmatprep.subr.mxu0 0.0
  %106 = vmatpush2.msra.mxu0 0.0
  %107 = vmatprep.subr.mxu0 0.0
  %108 = vmatpush2.msra.mxu0 0.0
  %109 = vmatprep.subr.mxu0 0.0
  %110 = vmatpush2.msra.mxu0 0.0
  %111 = vmatprep.subr.mxu0 0.0
  %112 = vmatpush2.msra.mxu0 0.0
  %113 = vmatprep.mubr.f32.mxu0 0.0
  %114 = vmatmul.mubr.f32.gmra.mxu0 %v38
  %v115 = vpop.f32.mrf.mxu0
  %v116 = vadd.f32 0.0, %v115
  %v117 = vpop.f32.mrf.mxu0
  %118 = vmatprep.mubr.f32.mxu0 0.0
  %119 = vmatmul.mubr.f32.gmra.mxu0 %v41
  %v120 = vpop.f32.mrf.mxu0
  %v121 = vadd.f32 0.0, %v120
  %v122 = vpop.f32.mrf.mxu0
  %123 = vmatprep.mubr.f32.mxu0 0.0
  %124 = vmatmul.mubr.f32.gmra.mxu0 %v44
  %v125 = vpop.f32.mrf.mxu0
  %v126 = vadd.f32 0.0, %v125
  %v127 = vpop.f32.mrf.mxu0
  %128 = vmatprep.mubr.f32.mxu0 0.0
  %129 = vmatmul.mubr.f32.gmra.mxu0 %v47
  %v130 = vpop.f32.mrf.mxu0
  %v131 = vadd.f32 0.0, %v130
  %v132 = vpop.f32.mrf.mxu0
  %133 = vdwg.mxu0
  %v135 = vsel %vm36, %v20, 0
  %v138 = vsel %vm36, %v22, 0
  %v141 = vsel %vm36, %v24, 0
  %v144 = vsel %vm36, %v26, 0
  %146 = vmatprep.subr.mxu0 0.0
  %147 = vmatpush1.msra.mxu0 0.0
  %148 = vmatprep.subr.mxu0 0.0
  %149 = vmatpush1.msra.mxu0 0.0
  %150 = vmatprep.subr.mxu0 0.0
  %151 = vmatpush1.msra.mxu0 0.0
  %152 = vmatprep.subr.mxu0 0.0
  %153 = vmatpush1.msra.mxu0 0.0
  %154 = vmatprep.subr.mxu0 0.0
  %155 = vmatpush1.msra.mxu0 0.0
  %156 = vmatprep.subr.mxu0 0.0
  %157 = vmatpush1.msra.mxu0 0.0
  %158 = vmatprep.subr.mxu0 0.0
  %159 = vmatpush1.msra.mxu0 0.0
  %160 = vmatprep.subr.mxu0 0.0
  %161 = vmatpush1.msra.mxu0 0.0
  %162 = vmatprep.subr.mxu0 0.0
  %163 = vmatpush1.msra.mxu0 0.0
  %164 = vmatprep.subr.mxu0 0.0
  %165 = vmatpush1.msra.mxu0 0.0
  %166 = vmatprep.subr.mxu0 0.0
  %167 = vmatpush1.msra.mxu0 0.0
  %168 = vmatprep.subr.mxu0 0.0
  %169 = vmatpush1.msra.mxu0 0.0
  %170 = vmatprep.subr.mxu0 0.0
  %171 = vmatpush1.msra.mxu0 %v31
  %172 = vmatprep.subr.mxu0 0.0
  %173 = vmatpush1.msra.mxu0 %v30
  %174 = vmatprep.subr.mxu0 0.0
  %175 = vmatpush1.msra.mxu0 %v29
  %176 = vmatprep.subr.mxu0 0.0
  %177 = vmatpush1.msra.mxu0 %v28
  %178 = vmatprep.subr.mxu0 0.0
  %179 = vmatpush2.msra.mxu0 0.0
  %180 = vmatprep.subr.mxu0 0.0
  %181 = vmatpush2.msra.mxu0 0.0
  %182 = vmatprep.subr.mxu0 0.0
  %183 = vmatpush2.msra.mxu0 0.0
  %184 = vmatprep.subr.mxu0 0.0
  %185 = vmatpush2.msra.mxu0 0.0
  %186 = vmatprep.subr.mxu0 0.0
  %187 = vmatpush2.msra.mxu0 0.0
  %188 = vmatprep.subr.mxu0 0.0
  %189 = vmatpush2.msra.mxu0 0.0
  %190 = vmatprep.subr.mxu0 0.0
  %191 = vmatpush2.msra.mxu0 0.0
  %192 = vmatprep.subr.mxu0 0.0
  %193 = vmatpush2.msra.mxu0 0.0
  %194 = vmatprep.subr.mxu0 0.0
  %195 = vmatpush2.msra.mxu0 0.0
  %196 = vmatprep.subr.mxu0 0.0
  %197 = vmatpush2.msra.mxu0 0.0
  %198 = vmatprep.subr.mxu0 0.0
  %199 = vmatpush2.msra.mxu0 0.0
  %200 = vmatprep.subr.mxu0 0.0
  %201 = vmatpush2.msra.mxu0 0.0
  %202 = vmatprep.subr.mxu0 0.0
  %203 = vmatpush2.msra.mxu0 0.0
  %204 = vmatprep.subr.mxu0 0.0
  %205 = vmatpush2.msra.mxu0 0.0
  %206 = vmatprep.subr.mxu0 0.0
  %207 = vmatpush2.msra.mxu0 0.0
  %208 = vmatprep.subr.mxu0 0.0
  %209 = vmatpush2.msra.mxu0 0.0
  %210 = vmatprep.mubr.f32.mxu0 0.0
  %211 = vmatmul.mubr.f32.gmra.mxu0 %v135
  %v212 = vpop.f32.mrf.mxu0
  %v213 = vadd.f32 %v116, %v212
  %v214 = vpop.f32.mrf.mxu0
  %215 = vmatprep.mubr.f32.mxu0 0.0
  %216 = vmatmul.mubr.f32.gmra.mxu0 %v138
  %v217 = vpop.f32.mrf.mxu0
  %v218 = vadd.f32 %v121, %v217
  %v219 = vpop.f32.mrf.mxu0
  %220 = vmatprep.mubr.f32.mxu0 0.0
  %221 = vmatmul.mubr.f32.gmra.mxu0 %v141
  %v222 = vpop.f32.mrf.mxu0
  %v223 = vadd.f32 %v126, %v222
  %v224 = vpop.f32.mrf.mxu0
  %225 = vmatprep.mubr.f32.mxu0 0.0
  %226 = vmatmul.mubr.f32.gmra.mxu0 %v144
  %v227 = vpop.f32.mrf.mxu0
  %v228 = vadd.f32 %v131, %v227
  %v229 = vpop.f32.mrf.mxu0
  %230 = vdwg.mxu0
  %v231 = vld [vmem:[%s4] sm:$0x1]
  %v233 = vlaneseq
  %v234 = vshrl.u32 %v233, 7
  %v235 = vsub.s32 0, %v234
  %v236 = vrot.slane %v231, %v235
  %v238 = vadd.f32 %v213, %v236
  %v239 = vadd.f32 %v218, %v236
  %v240 = vadd.f32 %v223, %v236
  %v241 = vadd.f32 %v228, %v236
  %v242 = vtanh.pop %v238
  %v243 = vtanh.pop %v239
  %v244 = vtanh.pop %v240
  %v245 = vtanh.pop %v241
  %v246 = vsel %vm36, %v242, %v243
  %vm247 = vcmask 523264
  %v248 = vsel %vm247, %v246, %v244
  %vm249 = vcmask 785408
  %v250 = vsel %vm249, %v248, %v245
  %251 = vst [vmem:[%s5] sm:$0xff] %v250
  // Predicated region
  $region22: #{hidden_bridge.1} parent=0 // pred_check
    _
  $region23: #{hidden_bridge.1} parent=0 // pred_check_branch
    %253 = sbr.rel (0) target = $region25
  $region24: #{hidden_bridge.1} parent=0 // pred_region
    _
  $region25: #{hidden_bridge.1} parent=0 // pred_fallthru
    _
  // Predicated region
  $region26: #{hidden_bridge.1} parent=0 // pred_check
    _
  $region27: #{hidden_bridge.1} parent=0 // pred_check_branch
    %255 = sbr.rel (0) target = $region29
  $region28: #{hidden_bridge.1} parent=0 // pred_region
    _
  $region29: #{hidden_bridge.1} parent=0 // pred_fallthru
    _

</llo_original>
